<compile_context>
chip_gen: v5e
topology: v5e:2x2
jax: 0.10.0
libtpu: 0.0.40
codegen_flags: <defaults>
</compile_context>

<pallas_src>
import jax
import jax.numpy as jnp
from jax.experimental import pallas as pl
from jax.experimental.pallas import tpu as pltpu


def _round_up(a, b):
    return (a + b - 1) // b * b


def _ffn_kernel(x_ref, w1_ref, b1_ref, w2_ref, b2_ref, o_ref, acc_ref):
    # x_ref:  (TM, E)        row tile (resident across the H axis)
    # w1_ref: (E, TH)        first-layer weight slab for this H tile
    # b1_ref: (1, TH)        first-layer bias slab
    # w2_ref: (TH, E)        second-layer weight slab for this H tile
    # b2_ref: (1, E)         second-layer bias (constant block)
    # o_ref:  (TM, E)        output row tile
    # acc_ref:(TM, E) f32    VMEM accumulator for the H reduction
    k = pl.program_id(1)

    @pl.when(k == 0)
    def _():
        # Fold b2 into the accumulator init (one f32 broadcast per row tile).
        acc_ref[...] = jnp.broadcast_to(
            b2_ref[...].astype(jnp.float32), acc_ref.shape)

    # Linear 1 on this hidden slab: native-dtype operands into the MXU,
    # f32 accumulation only.
    h = jnp.dot(x_ref[...], w1_ref[...],
                preferred_element_type=jnp.float32)
    h = h + b1_ref[...].astype(jnp.float32)

    # tanh-GELU: 0.5*x*(1 + tanh(sqrt(2/pi)*(x + 0.044715*x^3)))
    c = jnp.float32(0.7978845608028654)      # sqrt(2/pi)
    inner = c * (h + jnp.float32(0.044715) * (h * (h * h)))
    g = jnp.float32(0.5) * h * (jnp.float32(1.0) + jnp.tanh(inner))

    # Linear 2 partial product, accumulated in f32 VMEM scratch.
    acc_ref[...] += jnp.dot(g.astype(w2_ref.dtype), w2_ref[...],
                            preferred_element_type=jnp.float32)

    @pl.when(k == pl.num_programs(1) - 1)
    def _():
        o_ref[...] = acc_ref[...].astype(o_ref.dtype)


def feed_forward(x, w1, b1, w2, b2, *, tile_m=256, tile_h=512,
                 vmem_limit_bytes=64 * 1024 * 1024):
    """x: (B, T, E); w1: (E, 4E); b1: (4E,); w2: (4E, E); b2: (E,)."""
    B, T, E = x.shape
    H = w1.shape[1]
    M = B * T

    # --- tile selection ---------------------------------------------------
    # Row tile: multiple of 8 (sublane granularity), clamped to problem size.
    tm = min(tile_m, _round_up(M, 8))
    tm = max(8, _round_up(tm, 8))
    Mp = _round_up(M, tm)

    # Hidden tile: a multiple of 128 (lane granularity) that divides H;
    # fall back to the full hidden dim for odd sizes.
    if H % 128 == 0:
        th = max(128, min((tile_h // 128) * 128, H))
        while H % th != 0:
            th -= 128
    else:
        th = H

    x2d = x.reshape(M, E)
    if Mp != M:
        x2d = jnp.pad(x2d, ((0, Mp - M), (0, 0)))
    b1_2d = b1.reshape(1, H)
    b2_2d = b2.reshape(1, E)

    grid = (Mp // tm, H // th)

    out2d = pl.pallas_call(
        _ffn_kernel,
        out_shape=jax.ShapeDtypeStruct((Mp, E), x.dtype),
        grid=grid,
        in_specs=[
            pl.BlockSpec((tm, E), lambda i, k: (i, 0)),   # x rows (resident over k)
            pl.BlockSpec((E, th), lambda i, k: (0, k)),   # W1 slab streams over H
            pl.BlockSpec((1, th), lambda i, k: (0, k)),   # b1 slab
            pl.BlockSpec((th, E), lambda i, k: (k, 0)),   # W2 slab streams over H
            pl.BlockSpec((1, E), lambda i, k: (0, 0)),    # b2 (constant block)
        ],
        out_specs=pl.BlockSpec((tm, E), lambda i, k: (i, 0)),
        scratch_shapes=[pltpu.VMEM((tm, E), jnp.float32)],
        compiler_params=pltpu.CompilerParams(
            dimension_semantics=("parallel", "arbitrary"),
            vmem_limit_bytes=vmem_limit_bytes),
    )(x2d, w1, b1_2d, w2, b2_2d)

    if Mp != M:
        out2d = out2d[:M]
    return out2d.reshape(B, T, E)


if __name__ == "__main__":
    # Small config consistent with the module: cfg = {'emb_dim': 64}
    B, T, E = 2, 16, 64
    H = 4 * E

    key = jax.random.PRNGKey(0)
    kx, kw1, kb1, kw2, kb2 = jax.random.split(key, 5)

    x = jax.random.normal(kx, (B, T, E), dtype=jnp.float32)
    # Deterministic synthetic parameters (shapes from nn.Linear in __init__)
    w1 = jax.random.normal(kw1, (E, H), dtype=jnp.float32) * 0.02
    b1 = jax.random.normal(kb1, (H,), dtype=jnp.float32) * 0.02
    w2 = jax.random.normal(kw2, (H, E), dtype=jnp.float32) * 0.02
    b2 = jax.random.normal(kb2, (E,), dtype=jnp.float32) * 0.02

    # Small tiles so the demo exercises both grid axes (2 row tiles x 2 H tiles).
    out = feed_forward(x, w1, b1, w2, b2, tile_m=16, tile_h=128)
    jax.block_until_ready(out)

    # Reference check in plain JAX (same math as the PyTorch module)
    h_ref = x.reshape(-1, E) @ w1 + b1
    c = jnp.sqrt(2.0 / jnp.pi)
    g_ref = 0.5 * h_ref * (1.0 + jnp.tanh(c * (h_ref + 0.044715 * h_ref**3)))
    y_ref = (g_ref @ w2 + b2).reshape(B, T, E)
    assert jnp.allclose(out, y_ref, atol=1e-4, rtol=1e-4), "mismatch vs reference"

    print("KERNEL_OK")
</pallas_src>

<mosaic_0001>
module attributes {stable_mosaic.version = 11 : i64} {
  func.func @_ffn_kernel(%arg0: i32, %arg1: i32, %arg2: memref<16x64xf32, #tpu.memory_space<vmem>>, %arg3: memref<64x128xf32, #tpu.memory_space<vmem>>, %arg4: memref<1x128xf32, #tpu.memory_space<vmem>>, %arg5: memref<128x64xf32, #tpu.memory_space<vmem>>, %arg6: memref<1x64xf32, #tpu.memory_space<vmem>>, %arg7: memref<16x64xf32, #tpu.memory_space<vmem>>, %arg8: memref<16x64xf32, #tpu.memory_space<vmem>>) attributes {dimension_semantics = [#tpu.dimension_semantics<parallel>, #tpu.dimension_semantics<arbitrary>], iteration_bounds = array<i64: 2, 2>, scalar_prefetch = 0 : i64, scratch_operands = 1 : i64, tpu.core_type = #tpu.core_type<tc>, window_params = [{transform_indices = @transform_0, window_bounds = array<i64: 16, 64>}, {transform_indices = @transform_1, window_bounds = array<i64: 64, 128>}, {transform_indices = @transform_2, window_bounds = array<i64: 1, 128>}, {transform_indices = @transform_3, window_bounds = array<i64: 128, 64>}, {pipeline_mode = #tpu.pipeline_mode<synchronous>, transform_indices = @transform_4, window_bounds = array<i64: 1, 64>}, {transform_indices = @transform_5, window_bounds = array<i64: 16, 64>}]} {
    %c0_i32 = arith.constant 0 : i32
    %0 = arith.cmpi eq, %arg1, %c0_i32 : i32
    %1 = arith.extui %0 : i1 to i32
    %c0_i32_0 = arith.constant 0 : i32
    %2 = arith.cmpi ne, %1, %c0_i32_0 : i32
    scf.if %2 {
      %c0_18 = arith.constant 0 : index
      %c0_19 = arith.constant 0 : index
      %30 = vector.load %arg6[%c0_18, %c0_19] : memref<1x64xf32, #tpu.memory_space<vmem>>, vector<1x64xf32>
      %31 = vector.shape_cast %30 : vector<1x64xf32> to vector<1x64xf32>
      %32 = vector.broadcast %31 : vector<1x64xf32> to vector<16x64xf32>
      %c0_20 = arith.constant 0 : index
      %c0_21 = arith.constant 0 : index
      %33 = vector.load %arg8[%c0_20, %c0_21] : memref<16x64xf32, #tpu.memory_space<vmem>>, vector<16x64xf32>
      tpu.vector_store %arg8[%c0_20, %c0_21], %32 {strides = array<i32>} : memref<16x64xf32, #tpu.memory_space<vmem>>, vector<16x64xf32>,
    } else {
    }
    %c0 = arith.constant 0 : index
    %c0_1 = arith.constant 0 : index
    %3 = vector.load %arg2[%c0, %c0_1] : memref<16x64xf32, #tpu.memory_space<vmem>>, vector<16x64xf32>
    %c0_2 = arith.constant 0 : index
    %c0_3 = arith.constant 0 : index
    %4 = vector.load %arg3[%c0_2, %c0_3] : memref<64x128xf32, #tpu.memory_space<vmem>>, vector<64x128xf32>
    %cst = arith.constant dense<0.000000e+00> : vector<16x128xf32>
    %5 = tpu.matmul %3, %4, %cst {dimension_numbers = #tpu.dot_dimension_numbers<[1], [0], [0], [1], [0, 0, 1, 1], [], []>} : vector<16x64xf32>, vector<64x128xf32>, vector<16x128xf32> -> vector<16x128xf32>
    %c0_4 = arith.constant 0 : index
    %c0_5 = arith.constant 0 : index
    %6 = vector.load %arg4[%c0_4, %c0_5] : memref<1x128xf32, #tpu.memory_space<vmem>>, vector<1x128xf32>
    %7 = vector.broadcast %6 : vector<1x128xf32> to vector<16x128xf32>
    %8 = arith.addf %5, %7 : vector<16x128xf32>
    %9 = arith.mulf %8, %8 : vector<16x128xf32>
    %10 = arith.mulf %8, %9 : vector<16x128xf32>
    %cst_6 = arith.constant 4.471500e-02 : f32
    %11 = vector.broadcast %cst_6 : f32 to vector<16x128xf32>
    %12 = arith.mulf %11, %10 : vector<16x128xf32>
    %13 = arith.addf %8, %12 : vector<16x128xf32>
    %cst_7 = arith.constant 0.797884583 : f32
    %14 = vector.broadcast %cst_7 : f32 to vector<16x128xf32>
    %15 = arith.mulf %14, %13 : vector<16x128xf32>
    %cst_8 = arith.constant 5.000000e-01 : f32
    %16 = vector.broadcast %cst_8 : f32 to vector<16x128xf32>
    %17 = arith.mulf %16, %8 : vector<16x128xf32>
    %18 = math.tanh %15 : vector<16x128xf32>
    %cst_9 = arith.constant 1.000000e+00 : f32
    %19 = vector.broadcast %cst_9 : f32 to vector<16x128xf32>
    %20 = arith.addf %19, %18 : vector<16x128xf32>
    %21 = arith.mulf %17, %20 : vector<16x128xf32>
    %c0_10 = arith.constant 0 : index
    %c0_11 = arith.constant 0 : index
    %22 = vector.load %arg8[%c0_10, %c0_11] : memref<16x64xf32, #tpu.memory_space<vmem>>, vector<16x64xf32>
    %c0_12 = arith.constant 0 : index
    %c0_13 = arith.constant 0 : index
    %23 = vector.load %arg5[%c0_12, %c0_13] : memref<128x64xf32, #tpu.memory_space<vmem>>, vector<128x64xf32>
    %cst_14 = arith.constant dense<0.000000e+00> : vector<16x64xf32>
    %24 = tpu.matmul %21, %23, %cst_14 {dimension_numbers = #tpu.dot_dimension_numbers<[1], [0], [0], [1], [0, 0, 1, 1], [], []>} : vector<16x128xf32>, vector<128x64xf32>, vector<16x64xf32> -> vector<16x64xf32>
    %25 = arith.addf %22, %24 : vector<16x64xf32>
    %c0_15 = arith.constant 0 : index
    %c0_16 = arith.constant 0 : index
    %26 = vector.load %arg8[%c0_15, %c0_16] : memref<16x64xf32, #tpu.memory_space<vmem>>, vector<16x64xf32>
    tpu.vector_store %arg8[%c0_15, %c0_16], %25 {strides = array<i32>} : memref<16x64xf32, #tpu.memory_space<vmem>>, vector<16x64xf32>,
    %c1_i32 = arith.constant 1 : i32
    %27 = arith.cmpi eq, %arg1, %c1_i32 : i32
    %28 = arith.extui %27 : i1 to i32
    %c0_i32_17 = arith.constant 0 : i32
    %29 = arith.cmpi ne, %28, %c0_i32_17 : i32
    scf.if %29 {
      %c0_18 = arith.constant 0 : index
      %c0_19 = arith.constant 0 : index
      %30 = vector.load %arg8[%c0_18, %c0_19] : memref<16x64xf32, #tpu.memory_space<vmem>>, vector<16x64xf32>
      %c0_20 = arith.constant 0 : index
      %c0_21 = arith.constant 0 : index
      %31 = vector.load %arg7[%c0_20, %c0_21] : memref<16x64xf32, #tpu.memory_space<vmem>>, vector<16x64xf32>
      tpu.vector_store %arg7[%c0_20, %c0_21], %30 {strides = array<i32>} : memref<16x64xf32, #tpu.memory_space<vmem>>, vector<16x64xf32>,
    } else {
    }
    return
  }
  func.func @transform_0(%arg0: i32, %arg1: i32) -> (i32, i32) {
    %c0_i32 = arith.constant 0 : i32
    %c0_i32_0 = arith.constant 0 : i32
    return %arg0, %c0_i32 : i32, i32
  }
  func.func @transform_1(%arg0: i32, %arg1: i32) -> (i32, i32) {
    %c0_i32 = arith.constant 0 : i32
    %c0_i32_0 = arith.constant 0 : i32
    return %c0_i32, %arg1 : i32, i32
  }
  func.func @transform_2(%arg0: i32, %arg1: i32) -> (i32, i32) {
    %c0_i32 = arith.constant 0 : i32
    %c0_i32_0 = arith.constant 0 : i32
    return %c0_i32, %arg1 : i32, i32
  }
  func.func @transform_3(%arg0: i32, %arg1: i32) -> (i32, i32) {
    %c0_i32 = arith.constant 0 : i32
    %c0_i32_0 = arith.constant 0 : i32
    return %arg1, %c0_i32 : i32, i32
  }
  func.func @transform_4(%arg0: i32, %arg1: i32) -> (i32, i32) {
    %c0_i32 = arith.constant 0 : i32
    %c0_i32_0 = arith.constant 0 : i32
    %c0_i32_1 = arith.constant 0 : i32
    return %c0_i32, %c0_i32_0 : i32, i32
  }
  func.func @transform_5(%arg0: i32, %arg1: i32) -> (i32, i32) {
    %c0_i32 = arith.constant 0 : i32
    %c0_i32_0 = arith.constant 0 : i32
    return %arg0, %c0_i32 : i32, i32
  }
}

</mosaic_0001>

<llo_original>
// kernel: tpu_custom_call.1
$region0: #{tpu_custom_call.1}
  #allocation0 [shape = 'u32[]', space=smem, size = 0x4, offset = 0x4, fixed_abs, tag = 'smem constant byte address 0x4 - core index']
  #allocation1 [shape = 'u32[72,128]{1,0:T(1,128)}', space=vmem, size = 0x9000, scoped, tag = 'internal scratch']
  #allocation2 [shape = 'f32[16,64]{1,0:T(8,128)}', space=vmem, size = 0x2000, scoped, tag = 'scratch operand']
  %s0 = inlined_call_operand.vmem [shape: f32[32,64], index: 0, kind: input, shape index: {}]
  %s1 = inlined_call_operand.vmem [shape: f32[64,256], index: 1, kind: input, shape index: {}]
  %s2 = inlined_call_operand.vmem [shape: f32[1,256], index: 2, kind: input, shape index: {}]
  %s3 = inlined_call_operand.vmem [shape: f32[256,64], index: 3, kind: input, shape index: {}]
  %s4 = inlined_call_operand.vmem [shape: f32[1,64], index: 4, kind: input, shape index: {}]
  %s5 = inlined_call_operand.hbm [shape: f32[32,64], index: 5, kind: output, shape index: {}]
  %s6 = sld [smem:[#allocation0]]
  $region99: #{tpu_custom_call.1} parent=0
    _
  %s8 = ssub.s32 1, %s6
  %s9 = scalar_select 0, %s8, %s6
  $region1: #{tpu_custom_call.1} parent=0
    #allocation3 [shape = 'u8[65536]{0}', space=vmem, size = 0x10000, scoped, tag = 'input window, operand 1']
    #allocation4 [shape = 'u8[16384]{0}', space=vmem, size = 0x4000, scoped, tag = 'output window, operand 0']
    #allocation5 [shape = 's32[2]{0}', space=sflag, size = 0x8, scoped, tag = 'scoped memory for tpu_custom_call.1']
    %10 = vsyncpa [#allocation5], 0
    %s11 = scalar_lea.sflag [#allocation5], 1
    %12 = vsyncpa %s11, 0
    loop: start=0, step=1, limit=6
    $region2: #{tpu_custom_call.1} parent=1 // loop_pre_header
      _
    $region3: #{tpu_custom_call.1} parent=1 // loop_header
      %s14 = sphi 0, %s18
      %p15 = scmp.ge.s32.totalorder %s14, 6
      %s21 = sphi 0, %s33
      %s22 = sphi 0, %s29
      %s23 = sphi 0, %s21
      %s24 = sphi 0, %s22
      %s25 = sphi 0, %s23
      %s26 = sphi 0, %s24
      %s36 = sphi 0, %s38
      %s39 = sphi 0, %s36
      %s40 = sphi 0, %s39
      %s56 = sphi 0, %s40
      %s62 = sphi 0, %s64
      %s65 = sphi 0, %s62
      %s66 = sphi 0, %s65
      %s82 = sphi 0, %s66
      %s88 = sphi 0, %s90
      %s91 = sphi 0, %s88
      %s92 = sphi 0, %s91
      %s108 = sphi 0, %s92
      %s114 = sphi 0, %s116
      %s117 = sphi 0, %s114
      %s118 = sphi 0, %s117
      %s134 = sphi 0, %s118
      %s138 = sphi 0, %s138
      %s140 = sphi 0, %s138
      %s141 = sphi 0, %s140
      %s155 = sphi 0, %s141
      %s161 = sphi 0, %s163
      %s164 = sphi 0, %s161
      %s165 = sphi 0, %s164
      %s181 = sphi 0, %s165
    $region4: #{tpu_custom_call.1} parent=1 // loop_header_branch
      %17 = sbr.rel (%p15) target = $region8
    $region5: #{tpu_custom_call.1} parent=1 // loop_body
      %s19 = ssub.s32 %s14, 1
      %s20 = ssub.s32 %s14, 2
      %s27 = sadd.s32 1, %s22
      %p28 = scmp.ge.s32.totalorder %s27, 2
      %s29 = scalar_select %p28, 0, %s27
      %s30 = sadd.s32 1, %s21
      %s31 = scalar_select %p28, %s30, %s21
      %p32 = scmp.ge.s32.totalorder %s31, 2
      %s33 = scalar_select %p32, 0, %s31
      %s34 = ssub.s32 %s21, %s33
      %p35 = scmp.eq.s32.totalorder %s34, 0
      %s37 = sadd.s32 %s36, 1
      %s38 = scalar_select %p35, %s36, %s37
      %p41 = pneg %p35
      %p42 = scmp.eq.s32.totalorder %s14, 3
      %p43 = por %p41, %p42
      %p44 = scmp.ne.s32.totalorder %s36, %s39
      %p45 = scmp.eq.s32.totalorder %s14, 0
      %p46 = por %p44, %p45
      %p47 = scmp.ne.s32.totalorder %s36, %s39
      %p48 = scmp.eq.s32.totalorder %s19, 3
      %p49 = por %p47, %p48
      %p50 = scmp.ne.s32.totalorder %s39, %s40
      %p51 = scmp.eq.s32.totalorder %s19, 0
      %p52 = por %p50, %p51
      %p53 = scmp.ne.s32.totalorder %s39, %s40
      %p54 = scmp.eq.s32.totalorder %s20, 3
      %p55 = por %p53, %p54
      %p57 = scmp.ne.s32.totalorder %s40, %s56
      %p58 = scmp.eq.s32.totalorder %s20, 0
      %p59 = por %p57, %p58
      %s60 = ssub.s32 %s22, %s29
      %p61 = scmp.eq.s32.totalorder %s60, 0
      %s63 = sadd.s32 %s62, 1
      %s64 = scalar_select %p61, %s62, %s63
      %p67 = pneg %p61
      %p68 = scmp.eq.s32.totalorder %s14, 3
      %p69 = por %p67, %p68
      %p70 = scmp.ne.s32.totalorder %s62, %s65
      %p71 = scmp.eq.s32.totalorder %s14, 0
      %p72 = por %p70, %p71
      %p73 = scmp.ne.s32.totalorder %s62, %s65
      %p74 = scmp.eq.s32.totalorder %s19, 3
      %p75 = por %p73, %p74
      %p76 = scmp.ne.s32.totalorder %s65, %s66
      %p77 = scmp.eq.s32.totalorder %s19, 0
      %p78 = por %p76, %p77
      %p79 = scmp.ne.s32.totalorder %s65, %s66
      %p80 = scmp.eq.s32.totalorder %s20, 3
      %p81 = por %p79, %p80
      %p83 = scmp.ne.s32.totalorder %s66, %s82
      %p84 = scmp.eq.s32.totalorder %s20, 0
      %p85 = por %p83, %p84
      %s86 = ssub.s32 %s22, %s29
      %p87 = scmp.eq.s32.totalorder %s86, 0
      %s89 = sadd.s32 %s88, 1
      %s90 = scalar_select %p87, %s88, %s89
      %p93 = pneg %p87
      %p94 = scmp.eq.s32.totalorder %s14, 3
      %p95 = por %p93, %p94
      %p96 = scmp.ne.s32.totalorder %s88, %s91
      %p97 = scmp.eq.s32.totalorder %s14, 0
      %p98 = por %p96, %p97
      %p99 = scmp.ne.s32.totalorder %s88, %s91
      %p100 = scmp.eq.s32.totalorder %s19, 3
      %p101 = por %p99, %p100
      %p102 = scmp.ne.s32.totalorder %s91, %s92
      %p103 = scmp.eq.s32.totalorder %s19, 0
      %p104 = por %p102, %p103
      %p105 = scmp.ne.s32.totalorder %s91, %s92
      %p106 = scmp.eq.s32.totalorder %s20, 3
      %p107 = por %p105, %p106
      %p109 = scmp.ne.s32.totalorder %s92, %s108
      %p110 = scmp.eq.s32.totalorder %s20, 0
      %p111 = por %p109, %p110
      %s112 = ssub.s32 %s22, %s29
      %p113 = scmp.eq.s32.totalorder %s112, 0
      %s115 = sadd.s32 %s114, 1
      %s116 = scalar_select %p113, %s114, %s115
      %p119 = pneg %p113
      %p120 = scmp.eq.s32.totalorder %s14, 3
      %p121 = por %p119, %p120
      %p122 = scmp.ne.s32.totalorder %s114, %s117
      %p123 = scmp.eq.s32.totalorder %s14, 0
      %p124 = por %p122, %p123
      %p125 = scmp.ne.s32.totalorder %s114, %s117
      %p126 = scmp.eq.s32.totalorder %s19, 3
      %p127 = por %p125, %p126
      %p128 = scmp.ne.s32.totalorder %s117, %s118
      %p129 = scmp.eq.s32.totalorder %s19, 0
      %p130 = por %p128, %p129
      %p131 = scmp.ne.s32.totalorder %s117, %s118
      %p132 = scmp.eq.s32.totalorder %s20, 3
      %p133 = por %p131, %p132
      %p135 = scmp.ne.s32.totalorder %s118, %s134
      %p136 = scmp.eq.s32.totalorder %s20, 0
      %p137 = por %p135, %p136
      %s139 = sadd.s32 %s138, 1
      %p142 = scmp.eq.s32.totalorder %s14, 3
      %p143 = scmp.ne.s32.totalorder %s138, %s140
      %p144 = scmp.eq.s32.totalorder %s14, 0
      %p145 = por %p143, %p144
      %p146 = scmp.ne.s32.totalorder %s138, %s140
      %p147 = scmp.eq.s32.totalorder %s19, 3
      %p148 = por %p146, %p147
      %p149 = scmp.ne.s32.totalorder %s140, %s141
      %p150 = scmp.eq.s32.totalorder %s19, 0
      %p151 = por %p149, %p150
      %p152 = scmp.ne.s32.totalorder %s140, %s141
      %p153 = scmp.eq.s32.totalorder %s20, 3
      %p154 = por %p152, %p153
      %p156 = scmp.ne.s32.totalorder %s141, %s155
      %p157 = scmp.eq.s32.totalorder %s20, 0
      %p158 = por %p156, %p157
      %s159 = ssub.s32 %s21, %s33
      %p160 = scmp.eq.s32.totalorder %s159, 0
      %s162 = sadd.s32 %s161, 1
      %s163 = scalar_select %p160, %s161, %s162
      %p166 = pneg %p160
      %p167 = scmp.eq.s32.totalorder %s14, 3
      %p168 = por %p166, %p167
      %p169 = scmp.ne.s32.totalorder %s161, %s164
      %p170 = scmp.eq.s32.totalorder %s14, 0
      %p171 = por %p169, %p170
      %p172 = scmp.ne.s32.totalorder %s161, %s164
      %p173 = scmp.eq.s32.totalorder %s19, 3
      %p174 = por %p172, %p173
      %p175 = scmp.ne.s32.totalorder %s164, %s165
      %p176 = scmp.eq.s32.totalorder %s19, 0
      %p177 = por %p175, %p176
      %p178 = scmp.ne.s32.totalorder %s164, %s165
      %p179 = scmp.eq.s32.totalorder %s20, 3
      %p180 = por %p178, %p179
      %p182 = scmp.ne.s32.totalorder %s165, %s181
      %p183 = scmp.eq.s32.totalorder %s20, 0
      %p184 = por %p182, %p183
      %p185 = scmp.le.s32.totalorder 1, %s14
      %p186 = scmp.lt.s32.totalorder %s14, 5
      %p187 = pnand %p185, %p186
      %p188 = pneg %p187
      // Predicated region
      $region9: #{tpu_custom_call.1} parent=5 // pred_check
        _
      $region10: #{tpu_custom_call.1} parent=5 // pred_check_branch
        %190 = sbr.rel (%p187) target = $region12
      $region11: #{tpu_custom_call.1} parent=5 // pred_region
        %s191 = ssub.s32 %s14, 1
        // Predicated region
        $region13: #{tpu_custom_call.1} parent=11 // pred_check
          %p192 = pneg %p151
        $region14: #{tpu_custom_call.1} parent=11 // pred_check_branch
          %194 = sbr.rel (%p192) target = $region16
        $region15: #{tpu_custom_call.1} parent=11 // pred_region
          _
        $region16: #{tpu_custom_call.1} parent=11 // pred_fallthru
          _
      $region12: #{tpu_custom_call.1} parent=5 // pred_fallthru
        _
      %p195 = scmp.lt.s32.totalorder %s14, 4
      // Predicated region
      $region17: #{tpu_custom_call.1} parent=5 // pred_check
        %p196 = pneg %p195
      $region18: #{tpu_custom_call.1} parent=5 // pred_check_branch
        %198 = sbr.rel (%p196) target = $region20
      $region19: #{tpu_custom_call.1} parent=5 // pred_region
        // Predicated region
        $region21: #{tpu_custom_call.1} parent=19 // pred_check
          %p199 = pneg %p46
        $region22: #{tpu_custom_call.1} parent=19 // pred_check_branch
          %201 = sbr.rel (%p199) target = $region24
        $region23: #{tpu_custom_call.1} parent=19 // pred_region
          %s202 = smul.u32 2, %s21
          %p203 = scmp.lt.s32.totalorder %s202, 3
          %s204 = scalar_select %p203, %s202, 3
          %s205 = smul.addr %s204, 8
          %s206 = scalar_lea.vmem %s0, %s205
          %s207 = smul.u32 2, %s21
        $region24: #{tpu_custom_call.1} parent=19 // pred_fallthru
          _
        // Predicated region
        $region25: #{tpu_custom_call.1} parent=19 // pred_check
          %p208 = pneg %p72
        $region26: #{tpu_custom_call.1} parent=19 // pred_check_branch
          %210 = sbr.rel (%p208) target = $region28
        $region27: #{tpu_custom_call.1} parent=19 // pred_region
          %s211 = sand.u32 %s62, 1
          %s212 = sand.u32 %s62, 1
          %s213 = smul.addr %s212, 64
          %s214 = scalar_lea.vmem [#allocation3], %s213
          %s215 = smul.addr %s22, 8
          %s216 = scalar_lea.vmem %s1, %s215
          // Predicated region
          $region29: #{tpu_custom_call.1} parent=27 // pred_check
            _
          $region30: #{tpu_custom_call.1} parent=27 // pred_check_branch
            %218 = sbr.rel (0) target = $region32
          $region31: #{tpu_custom_call.1} parent=27 // pred_region
            // Predicated region
            $region33: #{tpu_custom_call.1} parent=31 // pred_check
              _
            $region34: #{tpu_custom_call.1} parent=31 // pred_check_branch
              %220 = sbr.rel (0) target = $region36
            $region35: #{tpu_custom_call.1} parent=31 // pred_region
              // Predicated region
              $region48: #{tpu_custom_call.1} parent=35 // pred_check
                _
              $region49: #{tpu_custom_call.1} parent=35 // pred_check_branch
                %250 = sbr.rel (0) target = $region51
              $region50: #{tpu_custom_call.1} parent=35 // pred_region
                loop: start=0, step=1, limit=1
                $region52: #{tpu_custom_call.1} parent=50 // loop_pre_header
                  _
                $region53: #{tpu_custom_call.1} parent=50 // loop_header
                  %s252 = sphi 0, %s256
                  %p253 = scmp.ge.s32.totalorder %s252, 1
                  %s257 = sphi %s216, %s216
                  %s258 = sphi %s214, %s214
                $region54: #{tpu_custom_call.1} parent=50 // loop_header_branch
                  %255 = sbr.rel (%p253) target = $region58
                $region55: #{tpu_custom_call.1} parent=50 // loop_body
                  %v259 = vld [vmem:[%s257] sm:$0xff]
                  %260 = vst [vmem:[%s258] sm:$0xff] %v259
                  %v261 = vld [vmem:[%s257 + $0x10] sm:$0xff]
                  %262 = vst [vmem:[%s258 + $0x8] sm:$0xff] %v261
                  %v263 = vld [vmem:[%s257 + $0x20] sm:$0xff]
                  %264 = vst [vmem:[%s258 + $0x10] sm:$0xff] %v263
                  %v265 = vld [vmem:[%s257 + $0x30] sm:$0xff]
                  %266 = vst [vmem:[%s258 + $0x18] sm:$0xff] %v265
                  %v267 = vld [vmem:[%s257 + $0x40] sm:$0xff]
                  %268 = vst [vmem:[%s258 + $0x20] sm:$0xff] %v267
                  %v269 = vld [vmem:[%s257 + $0x50] sm:$0xff]
                  %270 = vst [vmem:[%s258 + $0x28] sm:$0xff] %v269
                  %v271 = vld [vmem:[%s257 + $0x60] sm:$0xff]
                  %272 = vst [vmem:[%s258 + $0x30] sm:$0xff] %v271
                  %v273 = vld [vmem:[%s257 + $0x70] sm:$0xff]
                  %274 = vst [vmem:[%s258 + $0x38] sm:$0xff] %v273
                $region56: #{tpu_custom_call.1} parent=50 // loop_footer
                  %s256 = sadd.s32 1, %s252
                $region57: #{tpu_custom_call.1} parent=50 // loop_footer_branch
                  %251 = sbr.rel target = $region53
                $region58: #{tpu_custom_call.1} parent=50 // loop_exit
                  _
              $region51: #{tpu_custom_call.1} parent=35 // pred_fallthru
                _
              // Predicated region
              $region59: #{tpu_custom_call.1} parent=35 // pred_check
                _
              $region60: #{tpu_custom_call.1} parent=35 // pred_check_branch
                %276 = sbr.rel target = $region62
              $region61: #{tpu_custom_call.1} parent=35 // pred_region
                _
              $region62: #{tpu_custom_call.1} parent=35 // pred_fallthru
                _
            $region36: #{tpu_custom_call.1} parent=31 // pred_fallthru
              _
            // Predicated region
            $region37: #{tpu_custom_call.1} parent=31 // pred_check
              _
            $region38: #{tpu_custom_call.1} parent=31 // pred_check_branch
              %222 = sbr.rel target = $region40
            $region39: #{tpu_custom_call.1} parent=31 // pred_region
              %s224 = ssub.s32 256, 1
              loop: start=0, step=1, limit=1
              $region41: #{tpu_custom_call.1} parent=39 // loop_pre_header
                _
              $region42: #{tpu_custom_call.1} parent=39 // loop_header
                %s226 = sphi 0, %s230
                %p227 = scmp.ge.s32.totalorder %s226, 1
                %s231 = sphi %s216, %s216
                %s232 = sphi %s214, %s214
              $region43: #{tpu_custom_call.1} parent=39 // loop_header_branch
                %229 = sbr.rel (%p227) target = $region47
              $region44: #{tpu_custom_call.1} parent=39 // loop_body
                %v233 = vld [vmem:[%s231] sm:%s224]
                %234 = vst [vmem:[%s232] sm:%s224] %v233
                %v235 = vld [vmem:[%s231 + $0x10] sm:%s224]
                %236 = vst [vmem:[%s232 + $0x8] sm:%s224] %v235
                %v237 = vld [vmem:[%s231 + $0x20] sm:%s224]
                %238 = vst [vmem:[%s232 + $0x10] sm:%s224] %v237
                %v239 = vld [vmem:[%s231 + $0x30] sm:%s224]
                %240 = vst [vmem:[%s232 + $0x18] sm:%s224] %v239
                %v241 = vld [vmem:[%s231 + $0x40] sm:%s224]
                %242 = vst [vmem:[%s232 + $0x20] sm:%s224] %v241
                %v243 = vld [vmem:[%s231 + $0x50] sm:%s224]
                %244 = vst [vmem:[%s232 + $0x28] sm:%s224] %v243
                %v245 = vld [vmem:[%s231 + $0x60] sm:%s224]
                %246 = vst [vmem:[%s232 + $0x30] sm:%s224] %v245
                %v247 = vld [vmem:[%s231 + $0x70] sm:%s224]
                %248 = vst [vmem:[%s232 + $0x38] sm:%s224] %v247
              $region45: #{tpu_custom_call.1} parent=39 // loop_footer
                %s230 = sadd.s32 1, %s226
              $region46: #{tpu_custom_call.1} parent=39 // loop_footer_branch
                %225 = sbr.rel target = $region42
              $region47: #{tpu_custom_call.1} parent=39 // loop_exit
                _
            $region40: #{tpu_custom_call.1} parent=31 // pred_fallthru
              _
          $region32: #{tpu_custom_call.1} parent=27 // pred_fallthru
            _
          %277 = vnop
        $region28: #{tpu_custom_call.1} parent=19 // pred_fallthru
          _
        // Predicated region
        $region63: #{tpu_custom_call.1} parent=19 // pred_check
          %p278 = pneg %p98
        $region64: #{tpu_custom_call.1} parent=19 // pred_check_branch
          %280 = sbr.rel (%p278) target = $region66
        $region65: #{tpu_custom_call.1} parent=19 // pred_region
          %p281 = scmp.lt.s32.totalorder %s22, 1
          %s282 = scalar_select %p281, %s22, 1
          %s283 = scalar_lea.vmem %s2, %s282
        $region66: #{tpu_custom_call.1} parent=19 // pred_fallthru
          _
        // Predicated region
        $region67: #{tpu_custom_call.1} parent=19 // pred_check
          %p284 = pneg %p124
        $region68: #{tpu_custom_call.1} parent=19 // pred_check_branch
          %286 = sbr.rel (%p284) target = $region70
        $region69: #{tpu_custom_call.1} parent=19 // pred_region
          %s287 = smul.u32 16, %s22
          %p288 = scmp.lt.s32.totalorder %s287, 31
          %s289 = scalar_select %p288, %s287, 31
          %s290 = smul.addr %s289, 8
          %s291 = scalar_lea.vmem %s3, %s290
          %s292 = smul.u32 16, %s22
        $region70: #{tpu_custom_call.1} parent=19 // pred_fallthru
          _
      $region20: #{tpu_custom_call.1} parent=5 // pred_fallthru
        _
      %p293 = scmp.le.s32.totalorder 1, %s14
      %p294 = scmp.lt.s32.totalorder %s14, 5
      %p295 = pnand %p293, %p294
      %p296 = pneg %p295
      // Predicated region
      $region71: #{tpu_custom_call.1} parent=5 // pred_check
        _
      $region72: #{tpu_custom_call.1} parent=5 // pred_check_branch
        %298 = sbr.rel (%p295) target = $region74
      $region73: #{tpu_custom_call.1} parent=5 // pred_region
        %s299 = ssub.s32 %s14, 1
        %s300 = sand.u32 %s65, 1
        %s301 = sand.u32 %s65, 1
        %s302 = smul.addr %s301, 64
        %s303 = scalar_lea.vmem [#allocation3], %s302
        // Predicated region
        $region75: #{tpu_custom_call.1} parent=73 // pred_check
          %p304 = pneg %p78
        $region76: #{tpu_custom_call.1} parent=73 // pred_check_branch
          %306 = sbr.rel (%p304) target = $region78
        $region77: #{tpu_custom_call.1} parent=73 // pred_region
          _
        $region78: #{tpu_custom_call.1} parent=73 // pred_fallthru
          _
        %s307 = smul.u32 2, %s23
        %p308 = scmp.lt.s32.totalorder %s307, 3
        %s309 = scalar_select %p308, %s307, 3
        %s310 = smul.addr %s309, 8
        %s311 = scalar_lea.vmem %s0, %s310
        %p312 = pneg %p52
        %p313 = pneg %p49
        %s314 = sand.u32 %s65, 1
        %s315 = sand.u32 %s65, 1
        %s316 = smul.addr %s315, 64
        %s317 = scalar_lea.vmem [#allocation3], %s316
        %p318 = pneg %p78
        %p319 = pneg %p75
        %p320 = scmp.lt.s32.totalorder %s24, 1
        %s321 = scalar_select %p320, %s24, 1
        %s322 = scalar_lea.vmem %s2, %s321
        %p323 = pneg %p104
        %p324 = pneg %p101
        %s325 = smul.u32 16, %s24
        %p326 = scmp.lt.s32.totalorder %s325, 31
        %s327 = scalar_select %p326, %s325, 31
        %s328 = smul.addr %s327, 8
        %s329 = scalar_lea.vmem %s3, %s328
        %p330 = pneg %p130
        %p331 = pneg %p127
        %p332 = pneg %p151
        %p333 = pneg %p148
        %p334 = pneg %p177
        %p335 = pneg %p174
        %s336 = sand.u32 %s164, 1
        %s337 = scalar_lea.sflag [#allocation5], %s336
        %s338 = sand.u32 %s164, 1
        %s339 = smul.addr %s338, 16
        %s340 = scalar_lea.vmem [#allocation4], %s339
        %s341 = smul.u32 2, %s23
        %p342 = scmp.lt.s32.totalorder %s341, 3
        %s343 = scalar_select %p342, %s341, 3
        %s344 = smul.addr %s343, 8
        %s345 = scalar_lea.vmem %s0, %s344
        %s346 = smul.u32 2, %s23
        %p347 = scmp.lt.s32.totalorder %s24, 1
        %s348 = scalar_select %p347, %s24, 1
        %s349 = scalar_lea.vmem %s2, %s348
        %s350 = smul.u32 16, %s24
        %p351 = scmp.lt.s32.totalorder %s350, 31
        %s352 = scalar_select %p351, %s350, 31
        %s353 = smul.addr %s352, 8
        %s354 = scalar_lea.vmem %s3, %s353
        %s355 = smul.u32 16, %s24
        %s356 = smul.u32 2, %s23
        %p357 = scmp.eq.s32.totalorder %s24, 0
        // Predicated region
        $region79: #{tpu_custom_call.1} parent=73 // pred_check
          %p358 = pneg %p357
        $region80: #{tpu_custom_call.1} parent=73 // pred_check_branch
          %360 = sbr.rel (%p358) target = $region82
        $region81: #{tpu_custom_call.1} parent=73 // pred_region
          %v361 = vld [vmem:[%s4] sm:$0x1]
          %v363 = vperm.slane %v361, 0
          %vm365 = vcmask 523264
          %366 = vst.msk [vmem:[#allocation2] sm:$0xff] %vm365, %v363
          %367 = vst.msk [vmem:[#allocation2 + $0x8] sm:$0xff] %vm365, %v363
        $region82: #{tpu_custom_call.1} parent=73 // pred_fallthru
          _
        %v368 = vld [vmem:[%s345] sm:$0xff]
        %v369 = vld [vmem:[%s345 + $0x8] sm:$0xff]
        %v370 = vld [vmem:[%s303] sm:$0xff]
        %v371 = vld [vmem:[%s303 + $0x8] sm:$0xff]
        %v372 = vld [vmem:[%s303 + $0x10] sm:$0xff]
        %v373 = vld [vmem:[%s303 + $0x18] sm:$0xff]
        %v374 = vld [vmem:[%s303 + $0x20] sm:$0xff]
        %v375 = vld [vmem:[%s303 + $0x28] sm:$0xff]
        %v376 = vld [vmem:[%s303 + $0x30] sm:$0xff]
        %v377 = vld [vmem:[%s303 + $0x38] sm:$0xff]
        %v378 = vld [vmem:[%s349] sm:$0x1]
        %v380 = vperm.slane %v378, 0
        %vm382 = vcmask 523264
        %v384 = vsel %vm382, %v368, 0
        %v387 = vsel %vm382, %v369, 0
        %389 = vmatpush.msra.mxu0 0.0
        %390 = vmatpush.msra.mxu0 0.0
        %391 = vmatpush.msra.mxu0 0.0
        %392 = vmatpush.msra.mxu0 0.0
        %393 = vmatpush.msra.mxu0 0.0
        %394 = vmatpush.msra.mxu0 0.0
        %395 = vmatpush.msra.mxu0 0.0
        %396 = vmatpush.msra.mxu0 0.0
        %397 = vmatpush.msra.mxu0 %v377
        %398 = vmatpush.msra.mxu0 %v376
        %399 = vmatpush.msra.mxu0 %v375
        %400 = vmatpush.msra.mxu0 %v374
        %401 = vmatpush.msra.mxu0 %v373
        %402 = vmatpush.msra.mxu0 %v372
        %403 = vmatpush.msra.mxu0 %v371
        %404 = vmatpush.msra.mxu0 %v370
        %405 = vmatmul.f32.gmra.mxu0 %v384
        %v406 = vpop.f32.mrf.mxu0
        %v407 = vadd.f32 %v380, %v406
        %408 = vmatmul.f32.gmra.mxu0 %v387
        %v409 = vpop.f32.mrf.mxu0
        %v410 = vadd.f32 %v380, %v409
        %411 = vdwg.mxu0
        %v412 = vmul.f32 %v407, %v407
        %v413 = vmul.f32 %v410, %v410
        %v414 = vmul.f32 %v407, %v412
        %v415 = vmul.f32 %v410, %v413
        %v416 = vmul.f32 %v414, 0.044715
        %v417 = vmul.f32 %v415, 0.044715
        %v418 = vadd.f32 %v407, %v416
        %v419 = vadd.f32 %v410, %v417
        %v420 = vmul.f32 %v418, 0.7978846
        %v421 = vmul.f32 %v419, 0.7978846
        %v422 = vmul.f32 %v407, 0.5
        %v423 = vmul.f32 %v410, 0.5
        %v424 = vtanh.pop %v420
        %v425 = vtanh.pop %v421
        %v426 = vadd.f32 %v424, 1.0
        %v427 = vadd.f32 %v425, 1.0
        %v428 = vmul.f32 %v422, %v426
        %v429 = vmul.f32 %v423, %v427
        %v430 = vld [vmem:[#allocation2] sm:$0xff]
        %v431 = vld [vmem:[#allocation2 + $0x8] sm:$0xff]
        %v432 = vld [vmem:[%s354] sm:$0xff]
        %v433 = vld [vmem:[%s354 + $0x8] sm:$0xff]
        %v434 = vld [vmem:[%s354 + $0x10] sm:$0xff]
        %v435 = vld [vmem:[%s354 + $0x18] sm:$0xff]
        %v436 = vld [vmem:[%s354 + $0x20] sm:$0xff]
        %v437 = vld [vmem:[%s354 + $0x28] sm:$0xff]
        %v438 = vld [vmem:[%s354 + $0x30] sm:$0xff]
        %v439 = vld [vmem:[%s354 + $0x38] sm:$0xff]
        %v440 = vld [vmem:[%s354 + $0x40] sm:$0xff]
        %v441 = vld [vmem:[%s354 + $0x48] sm:$0xff]
        %v442 = vld [vmem:[%s354 + $0x50] sm:$0xff]
        %v443 = vld [vmem:[%s354 + $0x58] sm:$0xff]
        %v444 = vld [vmem:[%s354 + $0x60] sm:$0xff]
        %v445 = vld [vmem:[%s354 + $0x68] sm:$0xff]
        %v446 = vld [vmem:[%s354 + $0x70] sm:$0xff]
        %v447 = vld [vmem:[%s354 + $0x78] sm:$0xff]
        %448 = vmatpush.msra.mxu0 %v447
        %449 = vmatpush.msra.mxu0 %v446
        %450 = vmatpush.msra.mxu0 %v445
        %451 = vmatpush.msra.mxu0 %v444
        %452 = vmatpush.msra.mxu0 %v443
        %453 = vmatpush.msra.mxu0 %v442
        %454 = vmatpush.msra.mxu0 %v441
        %455 = vmatpush.msra.mxu0 %v440
        %456 = vmatpush.msra.mxu0 %v439
        %457 = vmatpush.msra.mxu0 %v438
        %458 = vmatpush.msra.mxu0 %v437
        %459 = vmatpush.msra.mxu0 %v436
        %460 = vmatpush.msra.mxu0 %v435
        %461 = vmatpush.msra.mxu0 %v434
        %462 = vmatpush.msra.mxu0 %v433
        %463 = vmatpush.msra.mxu0 %v432
        %464 = vmatmul.f32.gmra.mxu0 %v428
        %v465 = vpop.f32.mrf.mxu0
        %v466 = vadd.f32 0.0, %v465
        %467 = vmatmul.f32.gmra.mxu0 %v429
        %v468 = vpop.f32.mrf.mxu0
        %v469 = vadd.f32 0.0, %v468
        %470 = vdwg.mxu0
        %v471 = vadd.f32 %v430, %v466
        %v472 = vadd.f32 %v431, %v469
        %473 = vst.msk [vmem:[#allocation2] sm:$0xff] %vm382, %v471
        %474 = vst.msk [vmem:[#allocation2 + $0x8] sm:$0xff] %vm382, %v472
        %p475 = scmp.eq.s32.totalorder %s24, 1
        // Predicated region
        $region83: #{tpu_custom_call.1} parent=73 // pred_check
          %p476 = pneg %p475
        $region84: #{tpu_custom_call.1} parent=73 // pred_check_branch
          %478 = sbr.rel (%p476) target = $region86
        $region85: #{tpu_custom_call.1} parent=73 // pred_region
          %v479 = vld [vmem:[#allocation2] sm:$0xff]
          %v480 = vld [vmem:[#allocation2 + $0x8] sm:$0xff]
          %481 = vst.msk [vmem:[%s340] sm:$0xff] %vm382, %v479
          %482 = vst.msk [vmem:[%s340 + $0x8] sm:$0xff] %vm382, %v480
        $region86: #{tpu_custom_call.1} parent=73 // pred_fallthru
          _
        %s483 = sand.u32 %s164, 1
        %s484 = scalar_lea.sflag [#allocation5], %s483
        %s485 = sand.u32 %s164, 1
        %s486 = smul.addr %s485, 16
        %s487 = scalar_lea.vmem [#allocation4], %s486
        // Predicated region
        $region87: #{tpu_custom_call.1} parent=73 // pred_check
          %p488 = pneg %p174
        $region88: #{tpu_custom_call.1} parent=73 // pred_check_branch
          %490 = sbr.rel (%p488) target = $region90
        $region89: #{tpu_custom_call.1} parent=73 // pred_region
          %s491 = smul.u32 2, %s23
          %493 = vsyncadd %s484, 0
          %s494 = smul.addr %s491, 8
          %s495 = scalar_lea.hbm %s5, %s494
          %s496 = sshll.u32 %s487, 4
          %s497 = int_to_ptr.vmem [resolvable:$true] %s496
          %s498 = sshll.u32 %s495, 4
          %s499 = int_to_ptr.hbm [resolvable:$true] %s498
          %504 = dma.vmem_to_hbm [thread:$0]  %s497, 256, %s499, %s484, 128, 128, 8
        $region90: #{tpu_custom_call.1} parent=73 // pred_fallthru
          _
      $region74: #{tpu_custom_call.1} parent=5 // pred_fallthru
        _
      %p505 = scmp.le.s32.totalorder 2, %s14
      // Predicated region
      $region91: #{tpu_custom_call.1} parent=5 // pred_check
        %p506 = pneg %p505
      $region92: #{tpu_custom_call.1} parent=5 // pred_check_branch
        %508 = sbr.rel (%p506) target = $region94
      $region93: #{tpu_custom_call.1} parent=5 // pred_region
        %s509 = ssub.s32 %s14, 2
        // Predicated region
        $region95: #{tpu_custom_call.1} parent=93 // pred_check
          %p510 = pneg %p180
        $region96: #{tpu_custom_call.1} parent=93 // pred_check_branch
          %512 = sbr.rel (%p510) target = $region98
        $region97: #{tpu_custom_call.1} parent=93 // pred_region
          %s513 = sand.u32 %s165, 1
          %s514 = scalar_lea.sflag [#allocation5], %s513
          %s515 = sand.u32 %s165, 1
          %s516 = smul.addr %s515, 16
          %s517 = scalar_lea.vmem [#allocation4], %s516
          %519 = dma.done %s514, 256
        $region98: #{tpu_custom_call.1} parent=93 // pred_fallthru
          _
      $region94: #{tpu_custom_call.1} parent=5 // pred_fallthru
        _
    $region6: #{tpu_custom_call.1} parent=1 // loop_footer
      %s18 = sadd.s32 1, %s14
    $region7: #{tpu_custom_call.1} parent=1 // loop_footer_branch
      %13 = sbr.rel target = $region3
    $region8: #{tpu_custom_call.1} parent=1 // loop_exit
      _
    %520 = vsyncpa [#allocation5], 1
    %s521 = scalar_lea.sflag [#allocation5], 1
    %522 = vsyncpa %s521, 1

</llo_original>
